<compile_context>
chip_gen: v7x
topology: tpu7x:2x2x1
jax: 0.10.0
libtpu: 0.0.40
codegen_flags: <defaults>
</compile_context>

<pallas_src>
import functools

import jax
import jax.numpy as jnp
from jax import lax
from jax.experimental import pallas as pl
from jax.experimental.pallas import tpu as pltpu

_VMEM_LIMIT = 48 * 1024 * 1024  # fits v7x's 64 MiB physical VMEM with headroom


def _round_up(x, m):
    return (x + m - 1) // m * m


# ------------------------- linear:  H = x @ W + b  (bf16 output) -------------

def _linear_kernel(x_ref, w_ref, b_ref, h_ref):
    h = jnp.dot(x_ref[...], w_ref[...], preferred_element_type=jnp.float32)
    h_ref[...] = (h + b_ref[...]).astype(h_ref.dtype)


def linear_bias(x, w, b, *, tm):
    """H = x @ W + b, tiled over rows of x; output in bf16 (feeds aggregation)."""
    M, K = x.shape
    K2, C = w.shape
    assert K == K2 and M % tm == 0 and C % 128 == 0
    flops = 2 * M * K * C
    bytes_accessed = M * K * 4 + K * C * 4 + C * 4 + M * C * 2
    return pl.pallas_call(
        _linear_kernel,
        out_shape=jax.ShapeDtypeStruct((M, C), jnp.bfloat16),
        grid_spec=pltpu.PrefetchScalarGridSpec(
            num_scalar_prefetch=0,
            grid=(M // tm,),
            in_specs=[
                pl.BlockSpec((tm, K), lambda i: (i, 0)),   # row tile of x
                pl.BlockSpec((K, C), lambda i: (0, 0)),    # full W (constant index)
                pl.BlockSpec((1, C), lambda i: (0, 0)),    # bias row
            ],
            out_specs=pl.BlockSpec((tm, C), lambda i: (i, 0)),
        ),
        compiler_params=pltpu.CompilerParams(
            dimension_semantics=("parallel",),
            vmem_limit_bytes=_VMEM_LIMIT),
        cost_estimate=pl.CostEstimate(
            flops=flops, transcendentals=0, bytes_accessed=bytes_accessed),
    )(x, w, b)


# ---------------- aggregation:  out = ReLU?(Adj^T @ H), K-tiled ---------------

def _aggregate_kernel(adj_ref, h_ref, o_ref, acc_ref, *, apply_relu):
    k = pl.program_id(1)

    @pl.when(k == 0)
    def _():
        acc_ref[...] = jnp.zeros_like(acc_ref)

    # out[i, c] += sum_k adj[k, i] * H[k, c]   (== Adj^T @ H, no HBM transpose)
    acc_ref[...] += lax.dot_general(
        adj_ref[...], h_ref[pl.ds(k * adj_ref.shape[0], adj_ref.shape[0]), :],
        dimension_numbers=(((0,), (0,)), ((), ())),
        preferred_element_type=jnp.float32)

    @pl.when(k == pl.num_programs(1) - 1)
    def _():
        out = acc_ref[...]
        if apply_relu:
            out = jnp.maximum(out, 0.0)
        o_ref[...] = out.astype(o_ref.dtype)


def aggregate(adj_bf16, h_bf16, *, apply_relu, tm, tk):
    """out = act(Adj^T @ H); Adj, H in bf16, f32 accumulation in VMEM scratch."""
    N, N2 = adj_bf16.shape
    Nh, C = h_bf16.shape
    assert N == N2 == Nh and N % tm == 0 and N % tk == 0 and C % 128 == 0
    kernel = functools.partial(_aggregate_kernel, apply_relu=apply_relu)
    flops = 2 * N * N * C
    bytes_accessed = N * N * 2 + N * C * 2 + N * C * 4
    return pl.pallas_call(
        kernel,
        out_shape=jax.ShapeDtypeStruct((N, C), jnp.float32),
        grid_spec=pltpu.PrefetchScalarGridSpec(
            num_scalar_prefetch=0,
            grid=(N // tm, N // tk),
            in_specs=[
                # adj[k_block, i_block]: transpose expressed in the contraction
                pl.BlockSpec((tk, tm), lambda i, k: (k, i)),
                # full H, constant block index -> DMA'd once, VMEM-resident
                pl.BlockSpec((Nh, C), lambda i, k: (0, 0)),
            ],
            out_specs=pl.BlockSpec((tm, C), lambda i, k: (i, 0)),
            scratch_shapes=[pltpu.VMEM((tm, C), jnp.float32)],
        ),
        compiler_params=pltpu.CompilerParams(
            dimension_semantics=("parallel", "arbitrary"),
            vmem_limit_bytes=_VMEM_LIMIT),
        cost_estimate=pl.CostEstimate(
            flops=flops, transcendentals=0, bytes_accessed=bytes_accessed),
    )(adj_bf16, h_bf16)


# ----------------------------- parameters ------------------------------------

def init_linear(key, fan_in, fan_out):
    """Deterministic nn.Linear-style init: U(-1/sqrt(fan_in), +1/sqrt(fan_in))."""
    kw, kb = jax.random.split(key)
    bound = 1.0 / float(fan_in) ** 0.5
    w = jax.random.uniform(kw, (fan_in, fan_out), jnp.float32, -bound, bound)
    b = jax.random.uniform(kb, (1, fan_out), jnp.float32, -bound, bound)
    return w, b


def make_gcn_sub_params(key, nfeat, nhid, nclass, n_layers=5):
    dims = [(nfeat, nhid)] + [(nhid, nhid)] * (n_layers - 2) + [(nhid, nclass)]
    keys = jax.random.split(key, len(dims))
    return [init_linear(k, fi, fo) for k, (fi, fo) in zip(keys, dims)]


# ----------------------------- forward ----------------------------------------

def _gcn_sub_forward(params, x, adj):
    """GCN_SUB.forward (inference mode: dropout == identity)."""
    N, F = x.shape
    nclass = params[-1][0].shape[1]
    n_layers = len(params)

    # Tile geometry: lane-dense channels (pad to 128), padded node count.
    n_pad = _round_up(N, 128)
    tm = min(256, n_pad)            # row tile (last dim of adj block -> x128)
    tk = min(1024, n_pad)           # reduction tile (second-to-last -> x8)
    n_pad = _round_up(n_pad, max(tm, tk))
    f_pad = _round_up(F, 128)

    # Pad inputs; adjacency cast once to bf16 (dominant HBM traffic).
    x_p = jnp.zeros((n_pad, f_pad), jnp.float32).at[:N, :F].set(
        x.astype(jnp.float32))
    adj_p = jnp.zeros((n_pad, n_pad), jnp.bfloat16).at[:N, :N].set(
        adj.astype(jnp.bfloat16))

    h_in = x_p
    in_dim_pad = f_pad
    for li, (w, b) in enumerate(params):
        last = li == n_layers - 1
        c = w.shape[1]
        c_pad = _round_up(c, 128)
        w_p = jnp.zeros((in_dim_pad, c_pad), jnp.float32).at[
            :w.shape[0], :c].set(w)
        b_p = jnp.zeros((1, c_pad), jnp.float32).at[:, :c].set(b)

        h = linear_bias(h_in, w_p, b_p, tm=tm)                       # (n_pad, c_pad) bf16
        h_in = aggregate(adj_p, h, apply_relu=not last, tm=tm, tk=tk)  # f32
        in_dim_pad = c_pad

    out = h_in[:N, :nclass]
    if nclass == 1:               # x.squeeze(1)
        out = out[:, 0]
    return out


gcn_sub_forward = jax.jit(_gcn_sub_forward)


def gcn_sub_reference(params, x, adj):
    """Pure-JAX f32 reference for correctness checking."""
    adj_t = adj.T
    x = x.astype(jnp.float32)
    n_layers = len(params)
    for li, (w, b) in enumerate(params):
        h = x @ w + b
        x = adj_t @ h
        if li != n_layers - 1:
            x = jnp.maximum(x, 0.0)
    if x.shape[1] == 1:
        x = x[:, 0]
    return x


if __name__ == "__main__":
    N, NFEAT, NHID, NCLASS, N_LAYERS = 128, 64, 32, 8, 5

    root = jax.random.PRNGKey(0)
    k_params, k_x, k_adj = jax.random.split(root, 3)

    params = make_gcn_sub_params(k_params, NFEAT, NHID, NCLASS, N_LAYERS)

    x = jax.random.normal(k_x, (N, NFEAT), jnp.float32)
    # dense weighted adjacency (row-normalized, like a learned SUBLIME graph)
    a_raw = jax.random.uniform(k_adj, (N, N), jnp.float32)
    adj = a_raw / jnp.sum(a_raw, axis=1, keepdims=True)

    out = gcn_sub_forward(params, x, adj)
    out = jax.block_until_ready(out)

    ref = gcn_sub_reference(params, x, adj)
    assert out.shape == (N, NCLASS), out.shape
    # bf16 adjacency / intermediate -> relaxed tolerance (f32 accumulation).
    assert jnp.allclose(out, ref, rtol=2e-2, atol=2e-2), "mismatch vs JAX reference"

    print("KERNEL_OK")
</pallas_src>

<mosaic_0001>
module attributes {stable_mosaic.version = 11 : i64} {
  func.func @_linear_kernel(%arg0: i32, %arg1: memref<128x128xf32, #tpu.memory_space<vmem>>, %arg2: memref<128x128xf32, #tpu.memory_space<vmem>>, %arg3: memref<1x128xf32, #tpu.memory_space<vmem>>, %arg4: memref<128x128xbf16, #tpu.memory_space<vmem>>) attributes {dimension_semantics = [#tpu.dimension_semantics<parallel>], iteration_bounds = array<i64: 1>, scalar_prefetch = 0 : i64, scratch_operands = 0 : i64, tpu.core_type = #tpu.core_type<tc>, window_params = [{transform_indices = @transform_0, window_bounds = array<i64: 128, 128>}, {pipeline_mode = #tpu.pipeline_mode<synchronous>, transform_indices = @transform_1, window_bounds = array<i64: 128, 128>}, {pipeline_mode = #tpu.pipeline_mode<synchronous>, transform_indices = @transform_2, window_bounds = array<i64: 1, 128>}, {transform_indices = @transform_3, window_bounds = array<i64: 128, 128>}]} {
    %c0 = arith.constant 0 : index
    %c0_0 = arith.constant 0 : index
    %0 = vector.load %arg1[%c0, %c0_0] : memref<128x128xf32, #tpu.memory_space<vmem>>, vector<128x128xf32>
    %c0_1 = arith.constant 0 : index
    %c0_2 = arith.constant 0 : index
    %1 = vector.load %arg2[%c0_1, %c0_2] : memref<128x128xf32, #tpu.memory_space<vmem>>, vector<128x128xf32>
    %cst = arith.constant dense<0.000000e+00> : vector<128x128xf32>
    %2 = tpu.matmul %0, %1, %cst {dimension_numbers = #tpu.dot_dimension_numbers<[1], [0], [0], [1], [0, 0, 1, 1], [], []>} : vector<128x128xf32>, vector<128x128xf32>, vector<128x128xf32> -> vector<128x128xf32>
    %c0_3 = arith.constant 0 : index
    %c0_4 = arith.constant 0 : index
    %3 = vector.load %arg3[%c0_3, %c0_4] : memref<1x128xf32, #tpu.memory_space<vmem>>, vector<1x128xf32>
    %4 = vector.broadcast %3 : vector<1x128xf32> to vector<128x128xf32>
    %5 = arith.addf %2, %4 : vector<128x128xf32>
    %6 = arith.truncf %5 : vector<128x128xf32> to vector<128x128xbf16>
    %c0_5 = arith.constant 0 : index
    %c0_6 = arith.constant 0 : index
    %7 = vector.load %arg4[%c0_5, %c0_6] : memref<128x128xbf16, #tpu.memory_space<vmem>>, vector<128x128xbf16>
    tpu.vector_store %arg4[%c0_5, %c0_6], %6 {strides = array<i32>} : memref<128x128xbf16, #tpu.memory_space<vmem>>, vector<128x128xbf16>,
    return
  }
  func.func @transform_0(%arg0: i32) -> (i32, i32) {
    %c0_i32 = arith.constant 0 : i32
    %c0_i32_0 = arith.constant 0 : i32
    return %arg0, %c0_i32 : i32, i32
  }
  func.func @transform_1(%arg0: i32) -> (i32, i32) {
    %c0_i32 = arith.constant 0 : i32
    %c0_i32_0 = arith.constant 0 : i32
    %c0_i32_1 = arith.constant 0 : i32
    return %c0_i32, %c0_i32_0 : i32, i32
  }
  func.func @transform_2(%arg0: i32) -> (i32, i32) {
    %c0_i32 = arith.constant 0 : i32
    %c0_i32_0 = arith.constant 0 : i32
    %c0_i32_1 = arith.constant 0 : i32
    return %c0_i32, %c0_i32_0 : i32, i32
  }
  func.func @transform_3(%arg0: i32) -> (i32, i32) {
    %c0_i32 = arith.constant 0 : i32
    %c0_i32_0 = arith.constant 0 : i32
    return %arg0, %c0_i32 : i32, i32
  }
}

module attributes {stable_mosaic.version = 11 : i64} {
  func.func @_aggregate_kernel(%arg0: i32, %arg1: i32, %arg2: memref<128x128xbf16, #tpu.memory_space<vmem>>, %arg3: memref<128x128xbf16, #tpu.memory_space<vmem>>, %arg4: memref<128x128xf32, #tpu.memory_space<vmem>>, %arg5: memref<128x128xf32, #tpu.memory_space<vmem>>) attributes {dimension_semantics = [#tpu.dimension_semantics<parallel>, #tpu.dimension_semantics<arbitrary>], iteration_bounds = array<i64: 1, 1>, scalar_prefetch = 0 : i64, scratch_operands = 1 : i64, tpu.core_type = #tpu.core_type<tc>, window_params = [{transform_indices = @transform_0, window_bounds = array<i64: 128, 128>}, {pipeline_mode = #tpu.pipeline_mode<synchronous>, transform_indices = @transform_1, window_bounds = array<i64: 128, 128>}, {transform_indices = @transform_2, window_bounds = array<i64: 128, 128>}]} {
    %c0_i32 = arith.constant 0 : i32
    %0 = arith.cmpi eq, %arg1, %c0_i32 : i32
    %1 = arith.extui %0 : i1 to i32
    %c0_i32_0 = arith.constant 0 : i32
    %2 = arith.cmpi ne, %1, %c0_i32_0 : i32
    scf.if %2 {
      %cst_9 = arith.constant 0.000000e+00 : f32
      %14 = vector.broadcast %cst_9 : f32 to vector<128x128xf32>
      %c0_10 = arith.constant 0 : index
      %c0_11 = arith.constant 0 : index
      %15 = vector.load %arg5[%c0_10, %c0_11] : memref<128x128xf32, #tpu.memory_space<vmem>>, vector<128x128xf32>
      tpu.vector_store %arg5[%c0_10, %c0_11], %14 {strides = array<i32>} : memref<128x128xf32, #tpu.memory_space<vmem>>, vector<128x128xf32>,
    } else {
    }
    %c0 = arith.constant 0 : index
    %c0_1 = arith.constant 0 : index
    %3 = vector.load %arg5[%c0, %c0_1] : memref<128x128xf32, #tpu.memory_space<vmem>>, vector<128x128xf32>
    %c0_2 = arith.constant 0 : index
    %c0_3 = arith.constant 0 : index
    %4 = vector.load %arg2[%c0_2, %c0_3] : memref<128x128xbf16, #tpu.memory_space<vmem>>, vector<128x128xbf16>
    %c128_i32 = arith.constant 128 : i32
    %5 = arith.muli %arg1, %c128_i32 : i32
    %6 = arith.index_cast %5 : i32 to index
    %c0_4 = arith.constant 0 : index
    %7 = vector.load %arg3[%6, %c0_4] : memref<128x128xbf16, #tpu.memory_space<vmem>>, vector<128x128xbf16>
    %cst = arith.constant dense<0.000000e+00> : vector<128x128xf32>
    %8 = tpu.matmul %4, %7, %cst {dimension_numbers = #tpu.dot_dimension_numbers<[0], [0], [1], [1], [0, 1, 1, 1], [], []>} : vector<128x128xbf16>, vector<128x128xbf16>, vector<128x128xf32> -> vector<128x128xf32>
    %9 = arith.addf %3, %8 : vector<128x128xf32>
    %c0_5 = arith.constant 0 : index
    %c0_6 = arith.constant 0 : index
    %10 = vector.load %arg5[%c0_5, %c0_6] : memref<128x128xf32, #tpu.memory_space<vmem>>, vector<128x128xf32>
    tpu.vector_store %arg5[%c0_5, %c0_6], %9 {strides = array<i32>} : memref<128x128xf32, #tpu.memory_space<vmem>>, vector<128x128xf32>,
    %c0_i32_7 = arith.constant 0 : i32
    %11 = arith.cmpi eq, %arg1, %c0_i32_7 : i32
    %12 = arith.extui %11 : i1 to i32
    %c0_i32_8 = arith.constant 0 : i32
    %13 = arith.cmpi ne, %12, %c0_i32_8 : i32
    scf.if %13 {
      %c0_9 = arith.constant 0 : index
      %c0_10 = arith.constant 0 : index
      %14 = vector.load %arg5[%c0_9, %c0_10] : memref<128x128xf32, #tpu.memory_space<vmem>>, vector<128x128xf32>
      %cst_11 = arith.constant 0.000000e+00 : f32
      %15 = vector.broadcast %cst_11 : f32 to vector<128x128xf32>
      %16 = arith.maximumf %14, %15 : vector<128x128xf32>
      %c0_12 = arith.constant 0 : index
      %c0_13 = arith.constant 0 : index
      %17 = vector.load %arg4[%c0_12, %c0_13] : memref<128x128xf32, #tpu.memory_space<vmem>>, vector<128x128xf32>
      tpu.vector_store %arg4[%c0_12, %c0_13], %16 {strides = array<i32>} : memref<128x128xf32, #tpu.memory_space<vmem>>, vector<128x128xf32>,
    } else {
    }
    return
  }
  func.func @transform_0(%arg0: i32, %arg1: i32) -> (i32, i32) {
    %c0_i32 = arith.constant 0 : i32
    return %arg1, %arg0 : i32, i32
  }
  func.func @transform_1(%arg0: i32, %arg1: i32) -> (i32, i32) {
    %c0_i32 = arith.constant 0 : i32
    %c0_i32_0 = arith.constant 0 : i32
    %c0_i32_1 = arith.constant 0 : i32
    return %c0_i32, %c0_i32_0 : i32, i32
  }
  func.func @transform_2(%arg0: i32, %arg1: i32) -> (i32, i32) {
    %c0_i32 = arith.constant 0 : i32
    %c0_i32_0 = arith.constant 0 : i32
    return %arg0, %c0_i32 : i32, i32
  }
}

module attributes {stable_mosaic.version = 11 : i64} {
  func.func @_aggregate_kernel(%arg0: i32, %arg1: i32, %arg2: memref<128x128xbf16, #tpu.memory_space<vmem>>, %arg3: memref<128x128xbf16, #tpu.memory_space<vmem>>, %arg4: memref<128x128xf32, #tpu.memory_space<vmem>>, %arg5: memref<128x128xf32, #tpu.memory_space<vmem>>) attributes {dimension_semantics = [#tpu.dimension_semantics<parallel>, #tpu.dimension_semantics<arbitrary>], iteration_bounds = array<i64: 1, 1>, scalar_prefetch = 0 : i64, scratch_operands = 1 : i64, tpu.core_type = #tpu.core_type<tc>, window_params = [{transform_indices = @transform_0, window_bounds = array<i64: 128, 128>}, {pipeline_mode = #tpu.pipeline_mode<synchronous>, transform_indices = @transform_1, window_bounds = array<i64: 128, 128>}, {transform_indices = @transform_2, window_bounds = array<i64: 128, 128>}]} {
    %c0_i32 = arith.constant 0 : i32
    %0 = arith.cmpi eq, %arg1, %c0_i32 : i32
    %1 = arith.extui %0 : i1 to i32
    %c0_i32_0 = arith.constant 0 : i32
    %2 = arith.cmpi ne, %1, %c0_i32_0 : i32
    scf.if %2 {
      %cst_9 = arith.constant 0.000000e+00 : f32
      %14 = vector.broadcast %cst_9 : f32 to vector<128x128xf32>
      %c0_10 = arith.constant 0 : index
      %c0_11 = arith.constant 0 : index
      %15 = vector.load %arg5[%c0_10, %c0_11] : memref<128x128xf32, #tpu.memory_space<vmem>>, vector<128x128xf32>
      tpu.vector_store %arg5[%c0_10, %c0_11], %14 {strides = array<i32>} : memref<128x128xf32, #tpu.memory_space<vmem>>, vector<128x128xf32>,
    } else {
    }
    %c0 = arith.constant 0 : index
    %c0_1 = arith.constant 0 : index
    %3 = vector.load %arg5[%c0, %c0_1] : memref<128x128xf32, #tpu.memory_space<vmem>>, vector<128x128xf32>
    %c0_2 = arith.constant 0 : index
    %c0_3 = arith.constant 0 : index
    %4 = vector.load %arg2[%c0_2, %c0_3] : memref<128x128xbf16, #tpu.memory_space<vmem>>, vector<128x128xbf16>
    %c128_i32 = arith.constant 128 : i32
    %5 = arith.muli %arg1, %c128_i32 : i32
    %6 = arith.index_cast %5 : i32 to index
    %c0_4 = arith.constant 0 : index
    %7 = vector.load %arg3[%6, %c0_4] : memref<128x128xbf16, #tpu.memory_space<vmem>>, vector<128x128xbf16>
    %cst = arith.constant dense<0.000000e+00> : vector<128x128xf32>
    %8 = tpu.matmul %4, %7, %cst {dimension_numbers = #tpu.dot_dimension_numbers<[0], [0], [1], [1], [0, 1, 1, 1], [], []>} : vector<128x128xbf16>, vector<128x128xbf16>, vector<128x128xf32> -> vector<128x128xf32>
    %9 = arith.addf %3, %8 : vector<128x128xf32>
    %c0_5 = arith.constant 0 : index
    %c0_6 = arith.constant 0 : index
    %10 = vector.load %arg5[%c0_5, %c0_6] : memref<128x128xf32, #tpu.memory_space<vmem>>, vector<128x128xf32>
    tpu.vector_store %arg5[%c0_5, %c0_6], %9 {strides = array<i32>} : memref<128x128xf32, #tpu.memory_space<vmem>>, vector<128x128xf32>,
    %c0_i32_7 = arith.constant 0 : i32
    %11 = arith.cmpi eq, %arg1, %c0_i32_7 : i32
    %12 = arith.extui %11 : i1 to i32
    %c0_i32_8 = arith.constant 0 : i32
    %13 = arith.cmpi ne, %12, %c0_i32_8 : i32
    scf.if %13 {
      %c0_9 = arith.constant 0 : index
      %c0_10 = arith.constant 0 : index
      %14 = vector.load %arg5[%c0_9, %c0_10] : memref<128x128xf32, #tpu.memory_space<vmem>>, vector<128x128xf32>
      %c0_11 = arith.constant 0 : index
      %c0_12 = arith.constant 0 : index
      %15 = vector.load %arg4[%c0_11, %c0_12] : memref<128x128xf32, #tpu.memory_space<vmem>>, vector<128x128xf32>
      tpu.vector_store %arg4[%c0_11, %c0_12], %14 {strides = array<i32>} : memref<128x128xf32, #tpu.memory_space<vmem>>, vector<128x128xf32>,
    } else {
    }
    return
  }
  func.func @transform_0(%arg0: i32, %arg1: i32) -> (i32, i32) {
    %c0_i32 = arith.constant 0 : i32
    return %arg1, %arg0 : i32, i32
  }
  func.func @transform_1(%arg0: i32, %arg1: i32) -> (i32, i32) {
    %c0_i32 = arith.constant 0 : i32
    %c0_i32_0 = arith.constant 0 : i32
    %c0_i32_1 = arith.constant 0 : i32
    return %c0_i32, %c0_i32_0 : i32, i32
  }
  func.func @transform_2(%arg0: i32, %arg1: i32) -> (i32, i32) {
    %c0_i32 = arith.constant 0 : i32
    %c0_i32_0 = arith.constant 0 : i32
    return %arg0, %c0_i32 : i32, i32
  }
}

</mosaic_0001>

<llo_original>
// kernel: _gcn_sub_forward.10
$region0: #{_gcn_sub_forward.10}
  #allocation0 [shape = 'u32[]', space=smem, size = 0x4, offset = 0x4, fixed_abs, tag = 'smem constant byte address 0x4 - core index']
  #allocation1 [shape = 'u32[144,128]{1,0:T(1,128)}', space=vmem, size = 0x12000, scoped, tag = 'internal scratch']
  %s0 = inlined_call_operand.vmem [shape: f32[128,128], index: 0, kind: input, shape index: {}]
  %s1 = inlined_call_operand.vmem [shape: f32[128,128], index: 1, kind: input, shape index: {}]
  %s2 = inlined_call_operand.vmem [shape: f32[1,128], index: 2, kind: input, shape index: {}]
  %s3 = inlined_call_operand.vmem [shape: bf16[128,128], index: 3, kind: output, shape index: {}]
  %s4 = sld [smem:[#allocation0]]
  $region22: #{_gcn_sub_forward.10} parent=0
    _
  %s6 = ssub.s32 1, %s4
  %s7 = scalar_select 0, %s6, %s4
  // Predicated region
  $region2: #{_gcn_sub_forward.10} parent=0 // pred_check
    _
  $region3: #{_gcn_sub_forward.10} parent=0 // pred_check_branch
    %9 = sbr.rel (0) target = $region5
  $region4: #{_gcn_sub_forward.10} parent=0 // pred_region
    _
  $region5: #{_gcn_sub_forward.10} parent=0 // pred_fallthru
    _
  // Predicated region
  $region6: #{_gcn_sub_forward.10} parent=0 // pred_check
    _
  $region7: #{_gcn_sub_forward.10} parent=0 // pred_check_branch
    %11 = sbr.rel (0) target = $region9
  $region8: #{_gcn_sub_forward.10} parent=0 // pred_region
    _
  $region9: #{_gcn_sub_forward.10} parent=0 // pred_fallthru
    _
  // Predicated region
  $region10: #{_gcn_sub_forward.10} parent=0 // pred_check
    _
  $region11: #{_gcn_sub_forward.10} parent=0 // pred_check_branch
    %13 = sbr.rel (0) target = $region13
  $region12: #{_gcn_sub_forward.10} parent=0 // pred_region
    _
  $region13: #{_gcn_sub_forward.10} parent=0 // pred_fallthru
    _
  %v14 = vld [vmem:[%s0] sm:$0xff]
  %v15 = vld [vmem:[%s0 + $0x8] sm:$0xff]
  %v16 = vld [vmem:[%s0 + $0x10] sm:$0xff]
  %v17 = vld [vmem:[%s0 + $0x18] sm:$0xff]
  %v18 = vld [vmem:[%s0 + $0x20] sm:$0xff]
  %v19 = vld [vmem:[%s0 + $0x28] sm:$0xff]
  %v20 = vld [vmem:[%s0 + $0x30] sm:$0xff]
  %v21 = vld [vmem:[%s0 + $0x38] sm:$0xff]
  %v22 = vld [vmem:[%s0 + $0x40] sm:$0xff]
  %v23 = vld [vmem:[%s0 + $0x48] sm:$0xff]
  %v24 = vld [vmem:[%s0 + $0x50] sm:$0xff]
  %v25 = vld [vmem:[%s0 + $0x58] sm:$0xff]
  %v26 = vld [vmem:[%s0 + $0x60] sm:$0xff]
  %v27 = vld [vmem:[%s0 + $0x68] sm:$0xff]
  %v28 = vld [vmem:[%s0 + $0x70] sm:$0xff]
  %v29 = vld [vmem:[%s0 + $0x78] sm:$0xff]
  %v30 = vld [vmem:[%s1] sm:$0xff]
  %v31 = vld [vmem:[%s1 + $0x8] sm:$0xff]
  %v32 = vld [vmem:[%s1 + $0x10] sm:$0xff]
  %v33 = vld [vmem:[%s1 + $0x18] sm:$0xff]
  %v34 = vld [vmem:[%s1 + $0x20] sm:$0xff]
  %v35 = vld [vmem:[%s1 + $0x28] sm:$0xff]
  %v36 = vld [vmem:[%s1 + $0x30] sm:$0xff]
  %v37 = vld [vmem:[%s1 + $0x38] sm:$0xff]
  %v38 = vld [vmem:[%s1 + $0x40] sm:$0xff]
  %v39 = vld [vmem:[%s1 + $0x48] sm:$0xff]
  %v40 = vld [vmem:[%s1 + $0x50] sm:$0xff]
  %v41 = vld [vmem:[%s1 + $0x58] sm:$0xff]
  %v42 = vld [vmem:[%s1 + $0x60] sm:$0xff]
  %v43 = vld [vmem:[%s1 + $0x68] sm:$0xff]
  %v44 = vld [vmem:[%s1 + $0x70] sm:$0xff]
  %v45 = vld [vmem:[%s1 + $0x78] sm:$0xff]
  %v46 = vld [vmem:[%s2] sm:$0x1]
  %v48 = vlaneseq
  %v49 = vshrl.u32 %v48, 7
  %v50 = vsub.s32 0, %v49
  %v51 = vrot.slane %v46, %v50
  %53 = vmatprep.subr.mxu0 0.0
  %54 = vmatpush1.msra.mxu0 %v30
  %55 = vmatprep.subr.mxu0 0.0
  %56 = vmatpush1.msra.mxu0 %v31
  %57 = vmatprep.subr.mxu0 0.0
  %58 = vmatpush1.msra.mxu0 %v32
  %59 = vmatprep.subr.mxu0 0.0
  %60 = vmatpush1.msra.mxu0 %v33
  %61 = vmatprep.subr.mxu0 0.0
  %62 = vmatpush1.msra.mxu0 %v34
  %63 = vmatprep.subr.mxu0 0.0
  %64 = vmatpush1.msra.mxu0 %v35
  %65 = vmatprep.subr.mxu0 0.0
  %66 = vmatpush1.msra.mxu0 %v36
  %67 = vmatprep.subr.mxu0 0.0
  %68 = vmatpush1.msra.mxu0 %v37
  %69 = vmatprep.subr.mxu0 0.0
  %70 = vmatpush1.msra.mxu0 %v38
  %71 = vmatprep.subr.mxu0 0.0
  %72 = vmatpush1.msra.mxu0 %v39
  %73 = vmatprep.subr.mxu0 0.0
  %74 = vmatpush1.msra.mxu0 %v40
  %75 = vmatprep.subr.mxu0 0.0
  %76 = vmatpush1.msra.mxu0 %v41
  %77 = vmatprep.subr.mxu0 0.0
  %78 = vmatpush1.msra.mxu0 %v42
  %79 = vmatprep.subr.mxu0 0.0
  %80 = vmatpush1.msra.mxu0 %v43
  %81 = vmatprep.subr.mxu0 0.0
  %82 = vmatpush1.msra.mxu0 %v44
  %83 = vmatprep.subr.mxu0 0.0
  %84 = vmatpush1.msra.mxu0 %v45
  %85 = vmatprep.subr.mxu0 0.0
  %86 = vmatpush1.msra.mxu0 0.0
  %87 = vmatprep.subr.mxu0 0.0
  %88 = vmatpush1.msra.mxu0 0.0
  %89 = vmatprep.subr.mxu0 0.0
  %90 = vmatpush1.msra.mxu0 0.0
  %91 = vmatprep.subr.mxu0 0.0
  %92 = vmatpush1.msra.mxu0 0.0
  %93 = vmatprep.subr.mxu0 0.0
  %94 = vmatpush1.msra.mxu0 0.0
  %95 = vmatprep.subr.mxu0 0.0
  %96 = vmatpush1.msra.mxu0 0.0
  %97 = vmatprep.subr.mxu0 0.0
  %98 = vmatpush1.msra.mxu0 0.0
  %99 = vmatprep.subr.mxu0 0.0
  %100 = vmatpush1.msra.mxu0 0.0
  %101 = vmatprep.subr.mxu0 0.0
  %102 = vmatpush1.msra.mxu0 0.0
  %103 = vmatprep.subr.mxu0 0.0
  %104 = vmatpush1.msra.mxu0 0.0
  %105 = vmatprep.subr.mxu0 0.0
  %106 = vmatpush1.msra.mxu0 0.0
  %107 = vmatprep.subr.mxu0 0.0
  %108 = vmatpush1.msra.mxu0 0.0
  %109 = vmatprep.subr.mxu0 0.0
  %110 = vmatpush1.msra.mxu0 0.0
  %111 = vmatprep.subr.mxu0 0.0
  %112 = vmatpush1.msra.mxu0 0.0
  %113 = vmatprep.subr.mxu0 0.0
  %114 = vmatpush1.msra.mxu0 0.0
  %115 = vmatprep.subr.mxu0 0.0
  %116 = vmatpush1.msra.mxu0 0.0
  %117 = vmatprep.mubr.f32.mxu0 0.0
  %118 = vmatmul.mubr.f32.gmra.mrb[0].mxu0 %v14
  %v119 = vpop.f32.mrb[0].mxu0
  %v120 = vadd.f32 %v51, %v119
  %v121 = vpop.f32.mrb[0].mxu0
  %122 = vmatprep.mubr.f32.mxu0 0.0
  %123 = vmatmul.mubr.f32.gmra.mrb[0].mxu0 %v15
  %v124 = vpop.f32.mrb[0].mxu0
  %v125 = vadd.f32 %v51, %v124
  %v126 = vpop.f32.mrb[0].mxu0
  %127 = vmatprep.mubr.f32.mxu0 0.0
  %128 = vmatmul.mubr.f32.gmra.mrb[0].mxu0 %v16
  %v129 = vpop.f32.mrb[0].mxu0
  %v130 = vadd.f32 %v51, %v129
  %v131 = vpop.f32.mrb[0].mxu0
  %132 = vmatprep.mubr.f32.mxu0 0.0
  %133 = vmatmul.mubr.f32.gmra.mrb[0].mxu0 %v17
  %v134 = vpop.f32.mrb[0].mxu0
  %v135 = vadd.f32 %v51, %v134
  %v136 = vpop.f32.mrb[0].mxu0
  %137 = vmatprep.mubr.f32.mxu0 0.0
  %138 = vmatmul.mubr.f32.gmra.mrb[0].mxu0 %v18
  %v139 = vpop.f32.mrb[0].mxu0
  %v140 = vadd.f32 %v51, %v139
  %v141 = vpop.f32.mrb[0].mxu0
  %142 = vmatprep.mubr.f32.mxu0 0.0
  %143 = vmatmul.mubr.f32.gmra.mrb[0].mxu0 %v19
  %v144 = vpop.f32.mrb[0].mxu0
  %v145 = vadd.f32 %v51, %v144
  %v146 = vpop.f32.mrb[0].mxu0
  %147 = vmatprep.mubr.f32.mxu0 0.0
  %148 = vmatmul.mubr.f32.gmra.mrb[0].mxu0 %v20
  %v149 = vpop.f32.mrb[0].mxu0
  %v150 = vadd.f32 %v51, %v149
  %v151 = vpop.f32.mrb[0].mxu0
  %152 = vmatprep.mubr.f32.mxu0 0.0
  %153 = vmatmul.mubr.f32.gmra.mrb[0].mxu0 %v21
  %v154 = vpop.f32.mrb[0].mxu0
  %v155 = vadd.f32 %v51, %v154
  %v156 = vpop.f32.mrb[0].mxu0
  %157 = vmatprep.mubr.f32.mxu0 0.0
  %158 = vmatmul.mubr.f32.gmra.mrb[0].mxu0 %v22
  %v159 = vpop.f32.mrb[0].mxu0
  %v160 = vadd.f32 %v51, %v159
  %v161 = vpop.f32.mrb[0].mxu0
  %162 = vmatprep.mubr.f32.mxu0 0.0
  %163 = vmatmul.mubr.f32.gmra.mrb[0].mxu0 %v23
  %v164 = vpop.f32.mrb[0].mxu0
  %v165 = vadd.f32 %v51, %v164
  %v166 = vpop.f32.mrb[0].mxu0
  %167 = vmatprep.mubr.f32.mxu0 0.0
  %168 = vmatmul.mubr.f32.gmra.mrb[0].mxu0 %v24
  %v169 = vpop.f32.mrb[0].mxu0
  %v170 = vadd.f32 %v51, %v169
  %v171 = vpop.f32.mrb[0].mxu0
  %172 = vmatprep.mubr.f32.mxu0 0.0
  %173 = vmatmul.mubr.f32.gmra.mrb[0].mxu0 %v25
  %v174 = vpop.f32.mrb[0].mxu0
  %v175 = vadd.f32 %v51, %v174
  %v176 = vpop.f32.mrb[0].mxu0
  %177 = vmatprep.mubr.f32.mxu0 0.0
  %178 = vmatmul.mubr.f32.gmra.mrb[0].mxu0 %v26
  %v179 = vpop.f32.mrb[0].mxu0
  %v180 = vadd.f32 %v51, %v179
  %v181 = vpop.f32.mrb[0].mxu0
  %182 = vmatprep.mubr.f32.mxu0 0.0
  %183 = vmatmul.mubr.f32.gmra.mrb[0].mxu0 %v27
  %v184 = vpop.f32.mrb[0].mxu0
  %v185 = vadd.f32 %v51, %v184
  %v186 = vpop.f32.mrb[0].mxu0
  %187 = vmatprep.mubr.f32.mxu0 0.0
  %188 = vmatmul.mubr.f32.gmra.mrb[0].mxu0 %v28
  %v189 = vpop.f32.mrb[0].mxu0
  %v190 = vadd.f32 %v51, %v189
  %v191 = vpop.f32.mrb[0].mxu0
  %192 = vmatprep.mubr.f32.mxu0 0.0
  %193 = vmatmul.mubr.f32.gmra.mrb[0].mxu0 %v29
  %v194 = vpop.f32.mrb[0].mxu0
  %v195 = vadd.f32 %v51, %v194
  %v196 = vpop.f32.mrb[0].mxu0
  %197 = vdwg.mxu0
  %v198 = vpack.c.bf16 %v125, %v120
  %v199 = vpack.c.bf16 %v135, %v130
  %v200 = vpack.c.bf16 %v145, %v140
  %v201 = vpack.c.bf16 %v155, %v150
  %v202 = vpack.c.bf16 %v165, %v160
  %v203 = vpack.c.bf16 %v175, %v170
  %v204 = vpack.c.bf16 %v185, %v180
  %v205 = vpack.c.bf16 %v195, %v190
  %v214 = vunpack.c.l.b16 %v198
  %v215 = vunpack.c.h.b16 %v198
  %v216 = vunpack.c.l.b16 %v199
  %v217 = vunpack.c.h.b16 %v199
  %v218 = vunpack.c.l.b16 %v200
  %v219 = vunpack.c.h.b16 %v200
  %v220 = vunpack.c.l.b16 %v201
  %v221 = vunpack.c.h.b16 %v201
  %v222 = vunpack.c.l.b16 %v202
  %v223 = vunpack.c.h.b16 %v202
  %v224 = vunpack.c.l.b16 %v203
  %v225 = vunpack.c.h.b16 %v203
  %v226 = vunpack.c.l.b16 %v204
  %v227 = vunpack.c.h.b16 %v204
  %v228 = vunpack.c.l.b16 %v205
  %v229 = vunpack.c.h.b16 %v205
  %v230 = vpack.c.b16 %v214, %v214
  %v231 = vpack.c.b16 %v215, %v215
  %v232 = vpack.c.b16 %v216, %v216
  %v233 = vpack.c.b16 %v217, %v217
  %v234 = vpack.c.b16 %v218, %v218
  %v235 = vpack.c.b16 %v219, %v219
  %v236 = vpack.c.b16 %v220, %v220
  %v237 = vpack.c.b16 %v221, %v221
  %v238 = vpack.c.b16 %v222, %v222
  %v239 = vpack.c.b16 %v223, %v223
  %v240 = vpack.c.b16 %v224, %v224
  %v241 = vpack.c.b16 %v225, %v225
  %v242 = vpack.c.b16 %v226, %v226
  %v243 = vpack.c.b16 %v227, %v227
  %v244 = vpack.c.b16 %v228, %v228
  %v245 = vpack.c.b16 %v229, %v229
  %262 = vst [vmem:[%s3] sm:$0xf] %v230
  %263 = vst [vmem:[%s3 + $0x4] sm:$0xf] %v231
  %264 = vst [vmem:[%s3 + $0x8] sm:$0xf] %v232
  %265 = vst [vmem:[%s3 + $0xc] sm:$0xf] %v233
  %266 = vst [vmem:[%s3 + $0x10] sm:$0xf] %v234
  %267 = vst [vmem:[%s3 + $0x14] sm:$0xf] %v235
  %268 = vst [vmem:[%s3 + $0x18] sm:$0xf] %v236
  %269 = vst [vmem:[%s3 + $0x1c] sm:$0xf] %v237
  %270 = vst [vmem:[%s3 + $0x20] sm:$0xf] %v238
  %271 = vst [vmem:[%s3 + $0x24] sm:$0xf] %v239
  %272 = vst [vmem:[%s3 + $0x28] sm:$0xf] %v240
  %273 = vst [vmem:[%s3 + $0x2c] sm:$0xf] %v241
  %274 = vst [vmem:[%s3 + $0x30] sm:$0xf] %v242
  %275 = vst [vmem:[%s3 + $0x34] sm:$0xf] %v243
  %276 = vst [vmem:[%s3 + $0x38] sm:$0xf] %v244
  %277 = vst [vmem:[%s3 + $0x3c] sm:$0xf] %v245
  // Predicated region
  $region14: #{_gcn_sub_forward.10} parent=0 // pred_check
    _
  $region15: #{_gcn_sub_forward.10} parent=0 // pred_check_branch
    %279 = sbr.rel (0) target = $region17
  $region16: #{_gcn_sub_forward.10} parent=0 // pred_region
    _
  $region17: #{_gcn_sub_forward.10} parent=0 // pred_fallthru
    _
  // Predicated region
  $region18: #{_gcn_sub_forward.10} parent=0 // pred_check
    _
  $region19: #{_gcn_sub_forward.10} parent=0 // pred_check_branch
    %281 = sbr.rel (0) target = $region21
  $region20: #{_gcn_sub_forward.10} parent=0 // pred_region
    _
  $region21: #{_gcn_sub_forward.10} parent=0 // pred_fallthru
    _

// kernel: _gcn_sub_forward.11
$region0: #{_gcn_sub_forward.11}
  #allocation0 [shape = 'u32[]', space=smem, size = 0x4, offset = 0x4, fixed_abs, tag = 'smem constant byte address 0x4 - core index']
  #allocation1 [shape = 'u32[144,128]{1,0:T(1,128)}', space=vmem, size = 0x12000, scoped, tag = 'internal scratch']
  #allocation2 [shape = 'f32[128,128]{1,0:T(8,128)}', space=vmem, size = 0x10000, scoped, tag = 'scratch operand']
  %s0 = inlined_call_operand.vmem [shape: bf16[128,128], index: 0, kind: input, shape index: {}]
  %s1 = inlined_call_operand.vmem [shape: bf16[128,128], index: 1, kind: input, shape index: {}]
  %s2 = inlined_call_operand.vmem [shape: f32[128,128], index: 2, kind: output, shape index: {}]
  %s3 = sld [smem:[#allocation0]]
  $region26: #{_gcn_sub_forward.11} parent=0
    _
  %s5 = ssub.s32 1, %s3
  %s6 = scalar_select 0, %s5, %s3
  // Predicated region
  $region2: #{_gcn_sub_forward.11} parent=0 // pred_check
    _
  $region3: #{_gcn_sub_forward.11} parent=0 // pred_check_branch
    %8 = sbr.rel (0) target = $region5
  $region4: #{_gcn_sub_forward.11} parent=0 // pred_region
    _
  $region5: #{_gcn_sub_forward.11} parent=0 // pred_fallthru
    _
  // Predicated region
  $region6: #{_gcn_sub_forward.11} parent=0 // pred_check
    _
  $region7: #{_gcn_sub_forward.11} parent=0 // pred_check_branch
    %10 = sbr.rel (0) target = $region9
  $region8: #{_gcn_sub_forward.11} parent=0 // pred_region
    _
  $region9: #{_gcn_sub_forward.11} parent=0 // pred_fallthru
    _
  %p12 = scmp.eq.s32.totalorder 0, 0
  // Predicated region
  $region10: #{_gcn_sub_forward.11} parent=0 // pred_check
    %p13 = pneg %p12
  $region11: #{_gcn_sub_forward.11} parent=0 // pred_check_branch
    %15 = sbr.rel (%p13) target = $region13
  $region12: #{_gcn_sub_forward.11} parent=0 // pred_region
    %16 = vst [vmem:[#allocation2] sm:$0xff] 0.0
    %17 = vst [vmem:[#allocation2 + $0x8] sm:$0xff] 0.0
    %18 = vst [vmem:[#allocation2 + $0x10] sm:$0xff] 0.0
    %19 = vst [vmem:[#allocation2 + $0x18] sm:$0xff] 0.0
    %20 = vst [vmem:[#allocation2 + $0x20] sm:$0xff] 0.0
    %21 = vst [vmem:[#allocation2 + $0x28] sm:$0xff] 0.0
    %22 = vst [vmem:[#allocation2 + $0x30] sm:$0xff] 0.0
    %23 = vst [vmem:[#allocation2 + $0x38] sm:$0xff] 0.0
    %24 = vst [vmem:[#allocation2 + $0x40] sm:$0xff] 0.0
    %25 = vst [vmem:[#allocation2 + $0x48] sm:$0xff] 0.0
    %26 = vst [vmem:[#allocation2 + $0x50] sm:$0xff] 0.0
    %27 = vst [vmem:[#allocation2 + $0x58] sm:$0xff] 0.0
    %28 = vst [vmem:[#allocation2 + $0x60] sm:$0xff] 0.0
    %29 = vst [vmem:[#allocation2 + $0x68] sm:$0xff] 0.0
    %30 = vst [vmem:[#allocation2 + $0x70] sm:$0xff] 0.0
    %31 = vst [vmem:[#allocation2 + $0x78] sm:$0xff] 0.0
  $region13: #{_gcn_sub_forward.11} parent=0 // pred_fallthru
    _
  %v32 = vld [vmem:[#allocation2] sm:$0xff]
  %v33 = vld [vmem:[#allocation2 + $0x8] sm:$0xff]
  %v34 = vld [vmem:[#allocation2 + $0x10] sm:$0xff]
  %v35 = vld [vmem:[#allocation2 + $0x18] sm:$0xff]
  %v36 = vld [vmem:[#allocation2 + $0x20] sm:$0xff]
  %v37 = vld [vmem:[#allocation2 + $0x28] sm:$0xff]
  %v38 = vld [vmem:[#allocation2 + $0x30] sm:$0xff]
  %v39 = vld [vmem:[#allocation2 + $0x38] sm:$0xff]
  %v40 = vld [vmem:[#allocation2 + $0x40] sm:$0xff]
  %v41 = vld [vmem:[#allocation2 + $0x48] sm:$0xff]
  %v42 = vld [vmem:[#allocation2 + $0x50] sm:$0xff]
  %v43 = vld [vmem:[#allocation2 + $0x58] sm:$0xff]
  %v44 = vld [vmem:[#allocation2 + $0x60] sm:$0xff]
  %v45 = vld [vmem:[#allocation2 + $0x68] sm:$0xff]
  %v46 = vld [vmem:[#allocation2 + $0x70] sm:$0xff]
  %v47 = vld [vmem:[#allocation2 + $0x78] sm:$0xff]
  %v48 = vld [vmem:[%s0] sm:$0xf]
  %v49 = vld [vmem:[%s0 + $0x4] sm:$0xf]
  %v50 = vld [vmem:[%s0 + $0x8] sm:$0xf]
  %v51 = vld [vmem:[%s0 + $0xc] sm:$0xf]
  %v52 = vld [vmem:[%s0 + $0x10] sm:$0xf]
  %v53 = vld [vmem:[%s0 + $0x14] sm:$0xf]
  %v54 = vld [vmem:[%s0 + $0x18] sm:$0xf]
  %v55 = vld [vmem:[%s0 + $0x1c] sm:$0xf]
  %v56 = vld [vmem:[%s0 + $0x20] sm:$0xf]
  %v57 = vld [vmem:[%s0 + $0x24] sm:$0xf]
  %v58 = vld [vmem:[%s0 + $0x28] sm:$0xf]
  %v59 = vld [vmem:[%s0 + $0x2c] sm:$0xf]
  %v60 = vld [vmem:[%s0 + $0x30] sm:$0xf]
  %v61 = vld [vmem:[%s0 + $0x34] sm:$0xf]
  %v62 = vld [vmem:[%s0 + $0x38] sm:$0xf]
  %v63 = vld [vmem:[%s0 + $0x3c] sm:$0xf]
  %s64 = smul.u32 0, 128
  %s65 = sshra.s32 %s64, 3
  %s66 = sand.u32 %s64, 7
  %s67 = smul.addr %s65, 4
  %s68 = scalar_lea.vmem %s1, %s67
  %v69 = vld [vmem:[%s68] sm:$0xf]
  %v70 = vld [vmem:[%s68 + $0x4] sm:$0xf]
  %v71 = vld [vmem:[%s68 + $0x8] sm:$0xf]
  %v72 = vld [vmem:[%s68 + $0xc] sm:$0xf]
  %v73 = vld [vmem:[%s68 + $0x10] sm:$0xf]
  %v74 = vld [vmem:[%s68 + $0x14] sm:$0xf]
  %v75 = vld [vmem:[%s68 + $0x18] sm:$0xf]
  %v76 = vld [vmem:[%s68 + $0x1c] sm:$0xf]
  %v77 = vld [vmem:[%s68 + $0x20] sm:$0xf]
  %v78 = vld [vmem:[%s68 + $0x24] sm:$0xf]
  %v79 = vld [vmem:[%s68 + $0x28] sm:$0xf]
  %v80 = vld [vmem:[%s68 + $0x2c] sm:$0xf]
  %v81 = vld [vmem:[%s68 + $0x30] sm:$0xf]
  %v82 = vld [vmem:[%s68 + $0x34] sm:$0xf]
  %v83 = vld [vmem:[%s68 + $0x38] sm:$0xf]
  %v84 = vld [vmem:[%s68 + $0x3c] sm:$0xf]
  %v101 = vunpack.c.l.b16 %v48
  %v102 = vunpack.c.l.b16 %v49
  %v103 = vunpack.c.l.b16 %v50
  %v104 = vunpack.c.l.b16 %v51
  %v105 = vunpack.c.l.b16 %v52
  %v106 = vunpack.c.l.b16 %v53
  %v107 = vunpack.c.l.b16 %v54
  %v108 = vunpack.c.l.b16 %v55
  %v109 = vunpack.c.l.b16 %v56
  %v110 = vunpack.c.l.b16 %v57
  %v111 = vunpack.c.l.b16 %v58
  %v112 = vunpack.c.l.b16 %v59
  %v113 = vunpack.c.l.b16 %v60
  %v114 = vunpack.c.l.b16 %v61
  %v115 = vunpack.c.l.b16 %v62
  %v116 = vunpack.c.l.b16 %v63
  %v117 = vpack.c.b16 %v102, %v101
  %v118 = vpack.c.b16 %v104, %v103
  %v119 = vpack.c.b16 %v106, %v105
  %v120 = vpack.c.b16 %v108, %v107
  %v121 = vpack.c.b16 %v110, %v109
  %v122 = vpack.c.b16 %v112, %v111
  %v123 = vpack.c.b16 %v114, %v113
  %v124 = vpack.c.b16 %v116, %v115
  %133 = vxpose.xlu0.c.b16.start [1/8] %v117, 128
  %134 = vxpose.xlu0.c.b16.cont [2/8] %v118, 128
  %135 = vxpose.xlu0.c.b16.cont [3/8] %v119, 128
  %136 = vxpose.xlu0.c.b16.cont [4/8] %v120, 128
  %137 = vxpose.xlu0.c.b16.cont [5/8] %v121, 128
  %138 = vxpose.xlu0.c.b16.cont [6/8] %v122, 128
  %139 = vxpose.xlu0.c.b16.cont [7/8] %v123, 128
  %140 = vxpose.xlu0.c.b16.end [8/8] %v124, 128
  %v141 = vpop.trf.xlu0
  %v142 = vpop.trf.xlu0
  %v143 = vpop.trf.xlu0
  %v144 = vpop.trf.xlu0
  %v145 = vpop.trf.xlu0
  %v146 = vpop.trf.xlu0
  %v147 = vpop.trf.xlu0
  %v148 = vpop.trf.xlu0
  %v165 = vunpack.c.l.b16 %v69
  %v166 = vunpack.c.l.b16 %v70
  %v167 = vunpack.c.l.b16 %v71
  %v168 = vunpack.c.l.b16 %v72
  %v169 = vunpack.c.l.b16 %v73
  %v170 = vunpack.c.l.b16 %v74
  %v171 = vunpack.c.l.b16 %v75
  %v172 = vunpack.c.l.b16 %v76
  %v173 = vunpack.c.l.b16 %v77
  %v174 = vunpack.c.l.b16 %v78
  %v175 = vunpack.c.l.b16 %v79
  %v176 = vunpack.c.l.b16 %v80
  %v177 = vunpack.c.l.b16 %v81
  %v178 = vunpack.c.l.b16 %v82
  %v179 = vunpack.c.l.b16 %v83
  %v180 = vunpack.c.l.b16 %v84
  %v181 = vpack.c.b16 %v166, %v165
  %v182 = vpack.c.b16 %v168, %v167
  %v183 = vpack.c.b16 %v170, %v169
  %v184 = vpack.c.b16 %v172, %v171
  %v185 = vpack.c.b16 %v174, %v173
  %v186 = vpack.c.b16 %v176, %v175
  %v187 = vpack.c.b16 %v178, %v177
  %v188 = vpack.c.b16 %v180, %v179
  %197 = vmatprep.subr.bf16.mxu0 0
  %198 = vmatpush1.bf16.msra.mxu0 %v181
  %199 = vmatprep.subr.bf16.mxu0 0
  %200 = vmatpush1.bf16.msra.mxu0 %v182
  %201 = vmatprep.subr.bf16.mxu0 0
  %202 = vmatpush1.bf16.msra.mxu0 %v183
  %203 = vmatprep.subr.bf16.mxu0 0
  %204 = vmatpush1.bf16.msra.mxu0 %v184
  %205 = vmatprep.subr.bf16.mxu0 0
  %206 = vmatpush1.bf16.msra.mxu0 %v185
  %207 = vmatprep.subr.bf16.mxu0 0
  %208 = vmatpush1.bf16.msra.mxu0 %v186
  %209 = vmatprep.subr.bf16.mxu0 0
  %210 = vmatpush1.bf16.msra.mxu0 %v187
  %211 = vmatprep.subr.bf16.mxu0 0
  %212 = vmatpush1.bf16.msra.mxu0 %v188
  %213 = vmatprep.subr.bf16.mxu0 0
  %214 = vmatpush1.bf16.msra.mxu0 0
  %215 = vmatprep.subr.bf16.mxu0 0
  %216 = vmatpush1.bf16.msra.mxu0 0
  %217 = vmatprep.subr.bf16.mxu0 0
  %218 = vmatpush1.bf16.msra.mxu0 0
  %219 = vmatprep.subr.bf16.mxu0 0
  %220 = vmatpush1.bf16.msra.mxu0 0
  %221 = vmatprep.subr.bf16.mxu0 0
  %222 = vmatpush1.bf16.msra.mxu0 0
  %223 = vmatprep.subr.bf16.mxu0 0
  %224 = vmatpush1.bf16.msra.mxu0 0
  %225 = vmatprep.subr.bf16.mxu0 0
  %226 = vmatpush1.bf16.msra.mxu0 0
  %227 = vmatprep.subr.bf16.mxu0 0
  %228 = vmatpush1.bf16.msra.mxu0 0
  %229 = vmatprep.mubr.bf16.mxu0 0
  %230 = vmatmul.mubr.bf16.gmra.mrb[0].mxu0 %v141
  %v231 = vpop.f32.mrb[0].mxu0
  %v232 = vadd.f32 0.0, %v231
  %v233 = vpop.f32.mrb[0].mxu0
  %v234 = vpop.f32.mrb[0].mxu0
  %v235 = vadd.f32 0.0, %v234
  %v236 = vpop.f32.mrb[0].mxu0
  %237 = vmatprep.mubr.bf16.mxu0 0
  %238 = vmatmul.mubr.bf16.gmra.mrb[0].mxu0 %v142
  %v239 = vpop.f32.mrb[0].mxu0
  %v240 = vadd.f32 0.0, %v239
  %v241 = vpop.f32.mrb[0].mxu0
  %v242 = vpop.f32.mrb[0].mxu0
  %v243 = vadd.f32 0.0, %v242
  %v244 = vpop.f32.mrb[0].mxu0
  %245 = vmatprep.mubr.bf16.mxu0 0
  %246 = vmatmul.mubr.bf16.gmra.mrb[0].mxu0 %v143
  %v247 = vpop.f32.mrb[0].mxu0
  %v248 = vadd.f32 0.0, %v247
  %v249 = vpop.f32.mrb[0].mxu0
  %v250 = vpop.f32.mrb[0].mxu0
  %v251 = vadd.f32 0.0, %v250
  %v252 = vpop.f32.mrb[0].mxu0
  %253 = vmatprep.mubr.bf16.mxu0 0
  %254 = vmatmul.mubr.bf16.gmra.mrb[0].mxu0 %v144
  %v255 = vpop.f32.mrb[0].mxu0
  %v256 = vadd.f32 0.0, %v255
  %v257 = vpop.f32.mrb[0].mxu0
  %v258 = vpop.f32.mrb[0].mxu0
  %v259 = vadd.f32 0.0, %v258
  %v260 = vpop.f32.mrb[0].mxu0
  %261 = vmatprep.mubr.bf16.mxu0 0
  %262 = vmatmul.mubr.bf16.gmra.mrb[0].mxu0 %v145
  %v263 = vpop.f32.mrb[0].mxu0
  %v264 = vadd.f32 0.0, %v263
  %v265 = vpop.f32.mrb[0].mxu0
  %v266 = vpop.f32.mrb[0].mxu0
  %v267 = vadd.f32 0.0, %v266
  %v268 = vpop.f32.mrb[0].mxu0
  %269 = vmatprep.mubr.bf16.mxu0 0
  %270 = vmatmul.mubr.bf16.gmra.mrb[0].mxu0 %v146
  %v271 = vpop.f32.mrb[0].mxu0
  %v272 = vadd.f32 0.0, %v271
  %v273 = vpop.f32.mrb[0].mxu0
  %v274 = vpop.f32.mrb[0].mxu0
  %v275 = vadd.f32 0.0, %v274
  %v276 = vpop.f32.mrb[0].mxu0
  %277 = vmatprep.mubr.bf16.mxu0 0
  %278 = vmatmul.mubr.bf16.gmra.mrb[0].mxu0 %v147
  %v279 = vpop.f32.mrb[0].mxu0
  %v280 = vadd.f32 0.0, %v279
  %v281 = vpop.f32.mrb[0].mxu0
  %v282 = vpop.f32.mrb[0].mxu0
  %v283 = vadd.f32 0.0, %v282
  %v284 = vpop.f32.mrb[0].mxu0
  %285 = vmatprep.mubr.bf16.mxu0 0
  %286 = vmatmul.mubr.bf16.gmra.mrb[0].mxu0 %v148
  %v287 = vpop.f32.mrb[0].mxu0
  %v288 = vadd.f32 0.0, %v287
  %v289 = vpop.f32.mrb[0].mxu0
  %v290 = vpop.f32.mrb[0].mxu0
  %v291 = vadd.f32 0.0, %v290
  %v292 = vpop.f32.mrb[0].mxu0
  %293 = vdwg.mxu0
  %v294 = vadd.f32 %v32, %v232
  %v295 = vadd.f32 %v33, %v235
  %v296 = vadd.f32 %v34, %v240
  %v297 = vadd.f32 %v35, %v243
  %v298 = vadd.f32 %v36, %v248
  %v299 = vadd.f32 %v37, %v251
  %v300 = vadd.f32 %v38, %v256
  %v301 = vadd.f32 %v39, %v259
  %v302 = vadd.f32 %v40, %v264
  %v303 = vadd.f32 %v41, %v267
  %v304 = vadd.f32 %v42, %v272
  %v305 = vadd.f32 %v43, %v275
  %v306 = vadd.f32 %v44, %v280
  %v307 = vadd.f32 %v45, %v283
  %v308 = vadd.f32 %v46, %v288
  %v309 = vadd.f32 %v47, %v291
  %310 = vst [vmem:[#allocation2] sm:$0xff] %v294
  %311 = vst [vmem:[#allocation2 + $0x8] sm:$0xff] %v295
  %312 = vst [vmem:[#allocation2 + $0x10] sm:$0xff] %v296
  %313 = vst [vmem:[#allocation2 + $0x18] sm:$0xff] %v297
  %314 = vst [vmem:[#allocation2 + $0x20] sm:$0xff] %v298
  %315 = vst [vmem:[#allocation2 + $0x28] sm:$0xff] %v299
  %316 = vst [vmem:[#allocation2 + $0x30] sm:$0xff] %v300
  %317 = vst [vmem:[#allocation2 + $0x38] sm:$0xff] %v301
  %318 = vst [vmem:[#allocation2 + $0x40] sm:$0xff] %v302
  %319 = vst [vmem:[#allocation2 + $0x48] sm:$0xff] %v303
  %320 = vst [vmem:[#allocation2 + $0x50] sm:$0xff] %v304
  %321 = vst [vmem:[#allocation2 + $0x58] sm:$0xff] %v305
  %322 = vst [vmem:[#allocation2 + $0x60] sm:$0xff] %v306
  %323 = vst [vmem:[#allocation2 + $0x68] sm:$0xff] %v307
  %324 = vst [vmem:[#allocation2 + $0x70] sm:$0xff] %v308
  %325 = vst [vmem:[#allocation2 + $0x78] sm:$0xff] %v309
  // Predicated region
  $region14: #{_gcn_sub_forward.11} parent=0 // pred_check
    %p326 = pneg %p12
  $region15: #{_gcn_sub_forward.11} parent=0 // pred_check_branch
    %328 = sbr.rel (%p326) target = $region17
  $region16: #{_gcn_sub_forward.11} parent=0 // pred_region
    %v329 = vld [vmem:[#allocation2] sm:$0xff]
    %v330 = vld [vmem:[#allocation2 + $0x8] sm:$0xff]
    %v331 = vld [vmem:[#allocation2 + $0x10] sm:$0xff]
    %v332 = vld [vmem:[#allocation2 + $0x18] sm:$0xff]
    %v333 = vld [vmem:[#allocation2 + $0x20] sm:$0xff]
    %v334 = vld [vmem:[#allocation2 + $0x28] sm:$0xff]
    %v335 = vld [vmem:[#allocation2 + $0x30] sm:$0xff]
    %v336 = vld [vmem:[#allocation2 + $0x38] sm:$0xff]
    %v337 = vld [vmem:[#allocation2 + $0x40] sm:$0xff]
    %v338 = vld [vmem:[#allocation2 + $0x48] sm:$0xff]
    %v339 = vld [vmem:[#allocation2 + $0x50] sm:$0xff]
    %v340 = vld [vmem:[#allocation2 + $0x58] sm:$0xff]
    %v341 = vld [vmem:[#allocation2 + $0x60] sm:$0xff]
    %v342 = vld [vmem:[#allocation2 + $0x68] sm:$0xff]
    %v343 = vld [vmem:[#allocation2 + $0x70] sm:$0xff]
    %v344 = vld [vmem:[#allocation2 + $0x78] sm:$0xff]
    %v345 = vmax.f32 %v329, 0.0
    %v346 = vmax.f32 %v330, 0.0
    %v347 = vmax.f32 %v331, 0.0
    %v348 = vmax.f32 %v332, 0.0
    %v349 = vmax.f32 %v333, 0.0
    %v350 = vmax.f32 %v334, 0.0
    %v351 = vmax.f32 %v335, 0.0
    %v352 = vmax.f32 %v336, 0.0
    %v353 = vmax.f32 %v337, 0.0
    %v354 = vmax.f32 %v338, 0.0
    %v355 = vmax.f32 %v339, 0.0
    %v356 = vmax.f32 %v340, 0.0
    %v357 = vmax.f32 %v341, 0.0
    %v358 = vmax.f32 %v342, 0.0
    %v359 = vmax.f32 %v343, 0.0
    %v360 = vmax.f32 %v344, 0.0
    %361 = vst [vmem:[%s2] sm:$0xff] %v345
    %362 = vst [vmem:[%s2 + $0x8] sm:$0xff] %v346
    %363 = vst [vmem:[%s2 + $0x10] sm:$0xff] %v347
    %364 = vst [vmem:[%s2 + $0x18] sm:$0xff] %v348
    %365 = vst [vmem:[%s2 + $0x20] sm:$0xff] %v349
    %366 = vst [vmem:[%s2 + $0x28] sm:$0xff] %v350
    %367 = vst [vmem:[%s2 + $0x30] sm:$0xff] %v351
    %368 = vst [vmem:[%s2 + $0x38] sm:$0xff] %v352
    %369 = vst [vmem:[%s2 + $0x40] sm:$0xff] %v353
    %370 = vst [vmem:[%s2 + $0x48] sm:$0xff] %v354
    %371 = vst [vmem:[%s2 + $0x50] sm:$0xff] %v355
    %372 = vst [vmem:[%s2 + $0x58] sm:$0xff] %v356
    %373 = vst [vmem:[%s2 + $0x60] sm:$0xff] %v357
    %374 = vst [vmem:[%s2 + $0x68] sm:$0xff] %v358
    %375 = vst [vmem:[%s2 + $0x70] sm:$0xff] %v359
    %376 = vst [vmem:[%s2 + $0x78] sm:$0xff] %v360
  $region17: #{_gcn_sub_forward.11} parent=0 // pred_fallthru
    _
  // Predicated region
  $region18: #{_gcn_sub_forward.11} parent=0 // pred_check
    _
  $region19: #{_gcn_sub_forward.11} parent=0 // pred_check_branch
    %378 = sbr.rel (0) target = $region21
  $region20: #{_gcn_sub_forward.11} parent=0 // pred_region
    _
  $region21: #{_gcn_sub_forward.11} parent=0 // pred_fallthru
    _
  // Predicated region
  $region22: #{_gcn_sub_forward.11} parent=0 // pred_check
    _
  $region23: #{_gcn_sub_forward.11} parent=0 // pred_check_branch
    %380 = sbr.rel (0) target = $region25
  $region24: #{_gcn_sub_forward.11} parent=0 // pred_region
    _
  $region25: #{_gcn_sub_forward.11} parent=0 // pred_fallthru
    _

// kernel: _gcn_sub_forward.19
$region0: #{_gcn_sub_forward.19}
  #allocation0 [shape = 'u32[]', space=smem, size = 0x4, offset = 0x4, fixed_abs, tag = 'smem constant byte address 0x4 - core index']
  #allocation1 [shape = 'u32[144,128]{1,0:T(1,128)}', space=vmem, size = 0x12000, scoped, tag = 'internal scratch']
  #allocation2 [shape = 'f32[128,128]{1,0:T(8,128)}', space=vmem, size = 0x10000, scoped, tag = 'scratch operand']
  %s0 = inlined_call_operand.vmem [shape: bf16[128,128], index: 0, kind: input, shape index: {}]
  %s1 = inlined_call_operand.vmem [shape: bf16[128,128], index: 1, kind: input, shape index: {}]
  %s2 = inlined_call_operand.vmem [shape: f32[128,128], index: 2, kind: output, shape index: {}]
  %s3 = sld [smem:[#allocation0]]
  $region26: #{_gcn_sub_forward.19} parent=0
    _
  %s5 = ssub.s32 1, %s3
  %s6 = scalar_select 0, %s5, %s3
  // Predicated region
  $region2: #{_gcn_sub_forward.19} parent=0 // pred_check
    _
  $region3: #{_gcn_sub_forward.19} parent=0 // pred_check_branch
    %8 = sbr.rel (0) target = $region5
  $region4: #{_gcn_sub_forward.19} parent=0 // pred_region
    _
  $region5: #{_gcn_sub_forward.19} parent=0 // pred_fallthru
    _
  // Predicated region
  $region6: #{_gcn_sub_forward.19} parent=0 // pred_check
    _
  $region7: #{_gcn_sub_forward.19} parent=0 // pred_check_branch
    %10 = sbr.rel (0) target = $region9
  $region8: #{_gcn_sub_forward.19} parent=0 // pred_region
    _
  $region9: #{_gcn_sub_forward.19} parent=0 // pred_fallthru
    _
  %p12 = scmp.eq.s32.totalorder 0, 0
  // Predicated region
  $region10: #{_gcn_sub_forward.19} parent=0 // pred_check
    %p13 = pneg %p12
  $region11: #{_gcn_sub_forward.19} parent=0 // pred_check_branch
    %15 = sbr.rel (%p13) target = $region13
  $region12: #{_gcn_sub_forward.19} parent=0 // pred_region
    %16 = vst [vmem:[#allocation2] sm:$0xff] 0.0
    %17 = vst [vmem:[#allocation2 + $0x8] sm:$0xff] 0.0
    %18 = vst [vmem:[#allocation2 + $0x10] sm:$0xff] 0.0
    %19 = vst [vmem:[#allocation2 + $0x18] sm:$0xff] 0.0
    %20 = vst [vmem:[#allocation2 + $0x20] sm:$0xff] 0.0
    %21 = vst [vmem:[#allocation2 + $0x28] sm:$0xff] 0.0
    %22 = vst [vmem:[#allocation2 + $0x30] sm:$0xff] 0.0
    %23 = vst [vmem:[#allocation2 + $0x38] sm:$0xff] 0.0
    %24 = vst [vmem:[#allocation2 + $0x40] sm:$0xff] 0.0
    %25 = vst [vmem:[#allocation2 + $0x48] sm:$0xff] 0.0
    %26 = vst [vmem:[#allocation2 + $0x50] sm:$0xff] 0.0
    %27 = vst [vmem:[#allocation2 + $0x58] sm:$0xff] 0.0
    %28 = vst [vmem:[#allocation2 + $0x60] sm:$0xff] 0.0
    %29 = vst [vmem:[#allocation2 + $0x68] sm:$0xff] 0.0
    %30 = vst [vmem:[#allocation2 + $0x70] sm:$0xff] 0.0
    %31 = vst [vmem:[#allocation2 + $0x78] sm:$0xff] 0.0
  $region13: #{_gcn_sub_forward.19} parent=0 // pred_fallthru
    _
  %v32 = vld [vmem:[#allocation2] sm:$0xff]
  %v33 = vld [vmem:[#allocation2 + $0x8] sm:$0xff]
  %v34 = vld [vmem:[#allocation2 + $0x10] sm:$0xff]
  %v35 = vld [vmem:[#allocation2 + $0x18] sm:$0xff]
  %v36 = vld [vmem:[#allocation2 + $0x20] sm:$0xff]
  %v37 = vld [vmem:[#allocation2 + $0x28] sm:$0xff]
  %v38 = vld [vmem:[#allocation2 + $0x30] sm:$0xff]
  %v39 = vld [vmem:[#allocation2 + $0x38] sm:$0xff]
  %v40 = vld [vmem:[#allocation2 + $0x40] sm:$0xff]
  %v41 = vld [vmem:[#allocation2 + $0x48] sm:$0xff]
  %v42 = vld [vmem:[#allocation2 + $0x50] sm:$0xff]
  %v43 = vld [vmem:[#allocation2 + $0x58] sm:$0xff]
  %v44 = vld [vmem:[#allocation2 + $0x60] sm:$0xff]
  %v45 = vld [vmem:[#allocation2 + $0x68] sm:$0xff]
  %v46 = vld [vmem:[#allocation2 + $0x70] sm:$0xff]
  %v47 = vld [vmem:[#allocation2 + $0x78] sm:$0xff]
  %v48 = vld [vmem:[%s0] sm:$0xf]
  %v49 = vld [vmem:[%s0 + $0x4] sm:$0xf]
  %v50 = vld [vmem:[%s0 + $0x8] sm:$0xf]
  %v51 = vld [vmem:[%s0 + $0xc] sm:$0xf]
  %v52 = vld [vmem:[%s0 + $0x10] sm:$0xf]
  %v53 = vld [vmem:[%s0 + $0x14] sm:$0xf]
  %v54 = vld [vmem:[%s0 + $0x18] sm:$0xf]
  %v55 = vld [vmem:[%s0 + $0x1c] sm:$0xf]
  %v56 = vld [vmem:[%s0 + $0x20] sm:$0xf]
  %v57 = vld [vmem:[%s0 + $0x24] sm:$0xf]
  %v58 = vld [vmem:[%s0 + $0x28] sm:$0xf]
  %v59 = vld [vmem:[%s0 + $0x2c] sm:$0xf]
  %v60 = vld [vmem:[%s0 + $0x30] sm:$0xf]
  %v61 = vld [vmem:[%s0 + $0x34] sm:$0xf]
  %v62 = vld [vmem:[%s0 + $0x38] sm:$0xf]
  %v63 = vld [vmem:[%s0 + $0x3c] sm:$0xf]
  %s64 = smul.u32 0, 128
  %s65 = sshra.s32 %s64, 3
  %s66 = sand.u32 %s64, 7
  %s67 = smul.addr %s65, 4
  %s68 = scalar_lea.vmem %s1, %s67
  %v69 = vld [vmem:[%s68] sm:$0xf]
  %v70 = vld [vmem:[%s68 + $0x4] sm:$0xf]
  %v71 = vld [vmem:[%s68 + $0x8] sm:$0xf]
  %v72 = vld [vmem:[%s68 + $0xc] sm:$0xf]
  %v73 = vld [vmem:[%s68 + $0x10] sm:$0xf]
  %v74 = vld [vmem:[%s68 + $0x14] sm:$0xf]
  %v75 = vld [vmem:[%s68 + $0x18] sm:$0xf]
  %v76 = vld [vmem:[%s68 + $0x1c] sm:$0xf]
  %v77 = vld [vmem:[%s68 + $0x20] sm:$0xf]
  %v78 = vld [vmem:[%s68 + $0x24] sm:$0xf]
  %v79 = vld [vmem:[%s68 + $0x28] sm:$0xf]
  %v80 = vld [vmem:[%s68 + $0x2c] sm:$0xf]
  %v81 = vld [vmem:[%s68 + $0x30] sm:$0xf]
  %v82 = vld [vmem:[%s68 + $0x34] sm:$0xf]
  %v83 = vld [vmem:[%s68 + $0x38] sm:$0xf]
  %v84 = vld [vmem:[%s68 + $0x3c] sm:$0xf]
  %v101 = vunpack.c.l.b16 %v48
  %v102 = vunpack.c.l.b16 %v49
  %v103 = vunpack.c.l.b16 %v50
  %v104 = vunpack.c.l.b16 %v51
  %v105 = vunpack.c.l.b16 %v52
  %v106 = vunpack.c.l.b16 %v53
  %v107 = vunpack.c.l.b16 %v54
  %v108 = vunpack.c.l.b16 %v55
  %v109 = vunpack.c.l.b16 %v56
  %v110 = vunpack.c.l.b16 %v57
  %v111 = vunpack.c.l.b16 %v58
  %v112 = vunpack.c.l.b16 %v59
  %v113 = vunpack.c.l.b16 %v60
  %v114 = vunpack.c.l.b16 %v61
  %v115 = vunpack.c.l.b16 %v62
  %v116 = vunpack.c.l.b16 %v63
  %v117 = vpack.c.b16 %v102, %v101
  %v118 = vpack.c.b16 %v104, %v103
  %v119 = vpack.c.b16 %v106, %v105
  %v120 = vpack.c.b16 %v108, %v107
  %v121 = vpack.c.b16 %v110, %v109
  %v122 = vpack.c.b16 %v112, %v111
  %v123 = vpack.c.b16 %v114, %v113
  %v124 = vpack.c.b16 %v116, %v115
  %133 = vxpose.xlu0.c.b16.start [1/8] %v117, 128
  %134 = vxpose.xlu0.c.b16.cont [2/8] %v118, 128
  %135 = vxpose.xlu0.c.b16.cont [3/8] %v119, 128
  %136 = vxpose.xlu0.c.b16.cont [4/8] %v120, 128
  %137 = vxpose.xlu0.c.b16.cont [5/8] %v121, 128
  %138 = vxpose.xlu0.c.b16.cont [6/8] %v122, 128
  %139 = vxpose.xlu0.c.b16.cont [7/8] %v123, 128
  %140 = vxpose.xlu0.c.b16.end [8/8] %v124, 128
  %v141 = vpop.trf.xlu0
  %v142 = vpop.trf.xlu0
  %v143 = vpop.trf.xlu0
  %v144 = vpop.trf.xlu0
  %v145 = vpop.trf.xlu0
  %v146 = vpop.trf.xlu0
  %v147 = vpop.trf.xlu0
  %v148 = vpop.trf.xlu0
  %v165 = vunpack.c.l.b16 %v69
  %v166 = vunpack.c.l.b16 %v70
  %v167 = vunpack.c.l.b16 %v71
  %v168 = vunpack.c.l.b16 %v72
  %v169 = vunpack.c.l.b16 %v73
  %v170 = vunpack.c.l.b16 %v74
  %v171 = vunpack.c.l.b16 %v75
  %v172 = vunpack.c.l.b16 %v76
  %v173 = vunpack.c.l.b16 %v77
  %v174 = vunpack.c.l.b16 %v78
  %v175 = vunpack.c.l.b16 %v79
  %v176 = vunpack.c.l.b16 %v80
  %v177 = vunpack.c.l.b16 %v81
  %v178 = vunpack.c.l.b16 %v82
  %v179 = vunpack.c.l.b16 %v83
  %v180 = vunpack.c.l.b16 %v84
  %v181 = vpack.c.b16 %v166, %v165
  %v182 = vpack.c.b16 %v168, %v167
  %v183 = vpack.c.b16 %v170, %v169
  %v184 = vpack.c.b16 %v172, %v171
  %v185 = vpack.c.b16 %v174, %v173
  %v186 = vpack.c.b16 %v176, %v175
  %v187 = vpack.c.b16 %v178, %v177
  %v188 = vpack.c.b16 %v180, %v179
  %197 = vmatprep.subr.bf16.mxu0 0
  %198 = vmatpush1.bf16.msra.mxu0 %v181
  %199 = vmatprep.subr.bf16.mxu0 0
  %200 = vmatpush1.bf16.msra.mxu0 %v182
  %201 = vmatprep.subr.bf16.mxu0 0
  %202 = vmatpush1.bf16.msra.mxu0 %v183
  %203 = vmatprep.subr.bf16.mxu0 0
  %204 = vmatpush1.bf16.msra.mxu0 %v184
  %205 = vmatprep.subr.bf16.mxu0 0
  %206 = vmatpush1.bf16.msra.mxu0 %v185
  %207 = vmatprep.subr.bf16.mxu0 0
  %208 = vmatpush1.bf16.msra.mxu0 %v186
  %209 = vmatprep.subr.bf16.mxu0 0
  %210 = vmatpush1.bf16.msra.mxu0 %v187
  %211 = vmatprep.subr.bf16.mxu0 0
  %212 = vmatpush1.bf16.msra.mxu0 %v188
  %213 = vmatprep.subr.bf16.mxu0 0
  %214 = vmatpush1.bf16.msra.mxu0 0
  %215 = vmatprep.subr.bf16.mxu0 0
  %216 = vmatpush1.bf16.msra.mxu0 0
  %217 = vmatprep.subr.bf16.mxu0 0
  %218 = vmatpush1.bf16.msra.mxu0 0
  %219 = vmatprep.subr.bf16.mxu0 0
  %220 = vmatpush1.bf16.msra.mxu0 0
  %221 = vmatprep.subr.bf16.mxu0 0
  %222 = vmatpush1.bf16.msra.mxu0 0
  %223 = vmatprep.subr.bf16.mxu0 0
  %224 = vmatpush1.bf16.msra.mxu0 0
  %225 = vmatprep.subr.bf16.mxu0 0
  %226 = vmatpush1.bf16.msra.mxu0 0
  %227 = vmatprep.subr.bf16.mxu0 0
  %228 = vmatpush1.bf16.msra.mxu0 0
  %229 = vmatprep.mubr.bf16.mxu0 0
  %230 = vmatmul.mubr.bf16.gmra.mrb[0].mxu0 %v141
  %v231 = vpop.f32.mrb[0].mxu0
  %v232 = vadd.f32 0.0, %v231
  %v233 = vpop.f32.mrb[0].mxu0
  %v234 = vpop.f32.mrb[0].mxu0
  %v235 = vadd.f32 0.0, %v234
  %v236 = vpop.f32.mrb[0].mxu0
  %237 = vmatprep.mubr.bf16.mxu0 0
  %238 = vmatmul.mubr.bf16.gmra.mrb[0].mxu0 %v142
  %v239 = vpop.f32.mrb[0].mxu0
  %v240 = vadd.f32 0.0, %v239
  %v241 = vpop.f32.mrb[0].mxu0
  %v242 = vpop.f32.mrb[0].mxu0
  %v243 = vadd.f32 0.0, %v242
  %v244 = vpop.f32.mrb[0].mxu0
  %245 = vmatprep.mubr.bf16.mxu0 0
  %246 = vmatmul.mubr.bf16.gmra.mrb[0].mxu0 %v143
  %v247 = vpop.f32.mrb[0].mxu0
  %v248 = vadd.f32 0.0, %v247
  %v249 = vpop.f32.mrb[0].mxu0
  %v250 = vpop.f32.mrb[0].mxu0
  %v251 = vadd.f32 0.0, %v250
  %v252 = vpop.f32.mrb[0].mxu0
  %253 = vmatprep.mubr.bf16.mxu0 0
  %254 = vmatmul.mubr.bf16.gmra.mrb[0].mxu0 %v144
  %v255 = vpop.f32.mrb[0].mxu0
  %v256 = vadd.f32 0.0, %v255
  %v257 = vpop.f32.mrb[0].mxu0
  %v258 = vpop.f32.mrb[0].mxu0
  %v259 = vadd.f32 0.0, %v258
  %v260 = vpop.f32.mrb[0].mxu0
  %261 = vmatprep.mubr.bf16.mxu0 0
  %262 = vmatmul.mubr.bf16.gmra.mrb[0].mxu0 %v145
  %v263 = vpop.f32.mrb[0].mxu0
  %v264 = vadd.f32 0.0, %v263
  %v265 = vpop.f32.mrb[0].mxu0
  %v266 = vpop.f32.mrb[0].mxu0
  %v267 = vadd.f32 0.0, %v266
  %v268 = vpop.f32.mrb[0].mxu0
  %269 = vmatprep.mubr.bf16.mxu0 0
  %270 = vmatmul.mubr.bf16.gmra.mrb[0].mxu0 %v146
  %v271 = vpop.f32.mrb[0].mxu0
  %v272 = vadd.f32 0.0, %v271
  %v273 = vpop.f32.mrb[0].mxu0
  %v274 = vpop.f32.mrb[0].mxu0
  %v275 = vadd.f32 0.0, %v274
  %v276 = vpop.f32.mrb[0].mxu0
  %277 = vmatprep.mubr.bf16.mxu0 0
  %278 = vmatmul.mubr.bf16.gmra.mrb[0].mxu0 %v147
  %v279 = vpop.f32.mrb[0].mxu0
  %v280 = vadd.f32 0.0, %v279
  %v281 = vpop.f32.mrb[0].mxu0
  %v282 = vpop.f32.mrb[0].mxu0
  %v283 = vadd.f32 0.0, %v282
  %v284 = vpop.f32.mrb[0].mxu0
  %285 = vmatprep.mubr.bf16.mxu0 0
  %286 = vmatmul.mubr.bf16.gmra.mrb[0].mxu0 %v148
  %v287 = vpop.f32.mrb[0].mxu0
  %v288 = vadd.f32 0.0, %v287
  %v289 = vpop.f32.mrb[0].mxu0
  %v290 = vpop.f32.mrb[0].mxu0
  %v291 = vadd.f32 0.0, %v290
  %v292 = vpop.f32.mrb[0].mxu0
  %293 = vdwg.mxu0
  %v294 = vadd.f32 %v32, %v232
  %v295 = vadd.f32 %v33, %v235
  %v296 = vadd.f32 %v34, %v240
  %v297 = vadd.f32 %v35, %v243
  %v298 = vadd.f32 %v36, %v248
  %v299 = vadd.f32 %v37, %v251
  %v300 = vadd.f32 %v38, %v256
  %v301 = vadd.f32 %v39, %v259
  %v302 = vadd.f32 %v40, %v264
  %v303 = vadd.f32 %v41, %v267
  %v304 = vadd.f32 %v42, %v272
  %v305 = vadd.f32 %v43, %v275
  %v306 = vadd.f32 %v44, %v280
  %v307 = vadd.f32 %v45, %v283
  %v308 = vadd.f32 %v46, %v288
  %v309 = vadd.f32 %v47, %v291
  %310 = vst [vmem:[#allocation2] sm:$0xff] %v294
  %311 = vst [vmem:[#allocation2 + $0x8] sm:$0xff] %v295
  %312 = vst [vmem:[#allocation2 + $0x10] sm:$0xff] %v296
  %313 = vst [vmem:[#allocation2 + $0x18] sm:$0xff] %v297
  %314 = vst [vmem:[#allocation2 + $0x20] sm:$0xff] %v298
  %315 = vst [vmem:[#allocation2 + $0x28] sm:$0xff] %v299
  %316 = vst [vmem:[#allocation2 + $0x30] sm:$0xff] %v300
  %317 = vst [vmem:[#allocation2 + $0x38] sm:$0xff] %v301
  %318 = vst [vmem:[#allocation2 + $0x40] sm:$0xff] %v302
  %319 = vst [vmem:[#allocation2 + $0x48] sm:$0xff] %v303
  %320 = vst [vmem:[#allocation2 + $0x50] sm:$0xff] %v304
  %321 = vst [vmem:[#allocation2 + $0x58] sm:$0xff] %v305
  %322 = vst [vmem:[#allocation2 + $0x60] sm:$0xff] %v306
  %323 = vst [vmem:[#allocation2 + $0x68] sm:$0xff] %v307
  %324 = vst [vmem:[#allocation2 + $0x70] sm:$0xff] %v308
  %325 = vst [vmem:[#allocation2 + $0x78] sm:$0xff] %v309
  // Predicated region
  $region14: #{_gcn_sub_forward.19} parent=0 // pred_check
    %p326 = pneg %p12
  $region15: #{_gcn_sub_forward.19} parent=0 // pred_check_branch
    %328 = sbr.rel (%p326) target = $region17
  $region16: #{_gcn_sub_forward.19} parent=0 // pred_region
    %v329 = vld [vmem:[#allocation2] sm:$0xff]
    %v330 = vld [vmem:[#allocation2 + $0x8] sm:$0xff]
    %v331 = vld [vmem:[#allocation2 + $0x10] sm:$0xff]
    %v332 = vld [vmem:[#allocation2 + $0x18] sm:$0xff]
    %v333 = vld [vmem:[#allocation2 + $0x20] sm:$0xff]
    %v334 = vld [vmem:[#allocation2 + $0x28] sm:$0xff]
    %v335 = vld [vmem:[#allocation2 + $0x30] sm:$0xff]
    %v336 = vld [vmem:[#allocation2 + $0x38] sm:$0xff]
    %v337 = vld [vmem:[#allocation2 + $0x40] sm:$0xff]
    %v338 = vld [vmem:[#allocation2 + $0x48] sm:$0xff]
    %v339 = vld [vmem:[#allocation2 + $0x50] sm:$0xff]
    %v340 = vld [vmem:[#allocation2 + $0x58] sm:$0xff]
    %v341 = vld [vmem:[#allocation2 + $0x60] sm:$0xff]
    %v342 = vld [vmem:[#allocation2 + $0x68] sm:$0xff]
    %v343 = vld [vmem:[#allocation2 + $0x70] sm:$0xff]
    %v344 = vld [vmem:[#allocation2 + $0x78] sm:$0xff]
    %345 = vst [vmem:[%s2] sm:$0xff] %v329
    %346 = vst [vmem:[%s2 + $0x8] sm:$0xff] %v330
    %347 = vst [vmem:[%s2 + $0x10] sm:$0xff] %v331
    %348 = vst [vmem:[%s2 + $0x18] sm:$0xff] %v332
    %349 = vst [vmem:[%s2 + $0x20] sm:$0xff] %v333
    %350 = vst [vmem:[%s2 + $0x28] sm:$0xff] %v334
    %351 = vst [vmem:[%s2 + $0x30] sm:$0xff] %v335
    %352 = vst [vmem:[%s2 + $0x38] sm:$0xff] %v336
    %353 = vst [vmem:[%s2 + $0x40] sm:$0xff] %v337
    %354 = vst [vmem:[%s2 + $0x48] sm:$0xff] %v338
    %355 = vst [vmem:[%s2 + $0x50] sm:$0xff] %v339
    %356 = vst [vmem:[%s2 + $0x58] sm:$0xff] %v340
    %357 = vst [vmem:[%s2 + $0x60] sm:$0xff] %v341
    %358 = vst [vmem:[%s2 + $0x68] sm:$0xff] %v342
    %359 = vst [vmem:[%s2 + $0x70] sm:$0xff] %v343
    %360 = vst [vmem:[%s2 + $0x78] sm:$0xff] %v344
  $region17: #{_gcn_sub_forward.19} parent=0 // pred_fallthru
    _
  // Predicated region
  $region18: #{_gcn_sub_forward.19} parent=0 // pred_check
    _
  $region19: #{_gcn_sub_forward.19} parent=0 // pred_check_branch
    %362 = sbr.rel (0) target = $region21
  $region20: #{_gcn_sub_forward.19} parent=0 // pred_region
    _
  $region21: #{_gcn_sub_forward.19} parent=0 // pred_fallthru
    _
  // Predicated region
  $region22: #{_gcn_sub_forward.19} parent=0 // pred_check
    _
  $region23: #{_gcn_sub_forward.19} parent=0 // pred_check_branch
    %364 = sbr.rel (0) target = $region25
  $region24: #{_gcn_sub_forward.19} parent=0 // pred_region
    _
  $region25: #{_gcn_sub_forward.19} parent=0 // pred_fallthru
    _

</llo_original>
